<compile_context>
chip_gen: v7x
topology: tpu7x:2x2x1
jax: 0.10.0
libtpu: 0.0.40
codegen_flags: <defaults>
</compile_context>

<pallas_src>
import functools
import math

import jax
import jax.numpy as jnp
from jax.experimental import pallas as pl
from jax.experimental.pallas import tpu as pltpu

# ----------------------------- configuration -------------------------------
INPUT_DIM = 40
NUM_HIDDEN_LAYERS = 2
HIDDEN_DIM = 32
OUTPUT_DIM = 16
ACTIVATION = "relu"           # module asserts relu / sigmoid / tanh
BATCH = 2

LAYER_DIMS = tuple([INPUT_DIM] + [HIDDEN_DIM] * (NUM_HIDDEN_LAYERS + 1) + [OUTPUT_DIM])
N_LAYERS = len(LAYER_DIMS) - 1
D_PAD = 128                   # lane-dense packed feature width
ROW_TILE_CAP = 1024           # well under VMEM limits on v5e/v6e/v7x at these widths


def _round_up(x, m):
    return ((x + m - 1) // m) * m


def _activation(h):
    if ACTIVATION == "relu":
        return jnp.maximum(h, 0.0)
    if ACTIVATION == "sigmoid":
        return jax.nn.sigmoid(h)
    if ACTIVATION == "tanh":
        return jnp.tanh(h)
    raise ValueError(ACTIVATION)


# ------------------------------ Pallas kernel -------------------------------
def _siamese_mlp_kernel(layer_dims, x1_ref, x2_ref, w_ref, b_ref, o1_ref, o2_ref):
    """Both shared-weight branches over one row tile; packed weights resident.

    x*_ref : (row_tile, INPUT_DIM)   f32   (cast to bf16 in-kernel)
    w_ref  : (L, 128, 128)           bf16  zero-padded packed weights (resident)
    b_ref  : (L, 1, 128)             f32   zero-padded packed biases  (resident)
    o*_ref : (row_tile, OUTPUT_DIM)  f32
    """
    n_layers = len(layer_dims) - 1
    out_dim = layer_dims[-1]

    def forward_once(x_ref, o_ref):
        h = x_ref[...].astype(jnp.bfloat16)           # in-kernel f32 -> bf16 cast
        act = None
        for l in range(n_layers):                     # fully unrolled, static Ref slices
            k = layer_dims[0] if l == 0 else D_PAD    # only layer 0 has K < 128
            w = w_ref[l, :k, :]                       # (k, 128) bf16, zero-cost view
            acc = jnp.dot(h, w, preferred_element_type=jnp.float32)   # f32 accumulate
            acc = acc + b_ref[l]                      # (1, 128) broadcast
            act = _activation(acc)                    # f32, lane-dense (row_tile, 128)
            h = act.astype(jnp.bfloat16)
        # Narrow to the true output width only at the final store.  Padded lanes may
        # hold act(0) (e.g. sigmoid -> 0.5) but are never read back: the padded weight
        # ROWS of every layer are exactly zero and we slice to :out_dim here.
        o_ref[...] = act[:, :out_dim].astype(o_ref.dtype)

    forward_once(x1_ref, o1_ref)
    forward_once(x2_ref, o2_ref)


# ------------------------------- wrapper -------------------------------------
def _pick_row_tile(rows):
    if rows <= 8:
        return rows                                   # single full-extent block
    # >=2 tiles so the "parallel" axis shards across v7x's 2 TensorCores, tile size
    # ~= rows / n_tiles rounded to a sublane group so ragged-edge waste is < 8 rows.
    n_tiles = max(2, pl.cdiv(rows, ROW_TILE_CAP))
    return min(ROW_TILE_CAP, _round_up(pl.cdiv(rows, n_tiles), 8))


def siamese_forward(x1, x2, w_pack, b_pack):
    """Run BOTH shared-weight branches with one fused Pallas call (no wrapper copies)."""
    assert x1.shape == x2.shape and x1.shape[1] == INPUT_DIM
    rows = x1.shape[0]
    row_tile = _pick_row_tile(rows)
    grid = (pl.cdiv(rows, row_tile),)

    flops = 2 * 2 * rows * sum(a * b for a, b in zip(LAYER_DIMS[:-1], LAYER_DIMS[1:]))
    transcendentals = 0 if ACTIVATION == "relu" else 2 * rows * sum(LAYER_DIMS[1:])
    bytes_accessed = (2 * rows * INPUT_DIM * 4        # f32 activations in (both branches)
                      + w_pack.size * 2               # bf16 packed weights
                      + b_pack.size * 4               # f32 packed biases
                      + 2 * rows * OUTPUT_DIM * 4)    # f32 outputs

    kernel = functools.partial(_siamese_mlp_kernel, LAYER_DIMS)
    out1, out2 = pl.pallas_call(
        kernel,
        out_shape=(jax.ShapeDtypeStruct((rows, OUTPUT_DIM), jnp.float32),
                   jax.ShapeDtypeStruct((rows, OUTPUT_DIM), jnp.float32)),
        grid=grid,
        in_specs=[
            pl.BlockSpec((row_tile, INPUT_DIM), lambda i: (i, 0)),
            pl.BlockSpec((row_tile, INPUT_DIM), lambda i: (i, 0)),
            # constant index_maps -> packed weights / biases stay resident in VMEM
            pl.BlockSpec(w_pack.shape, lambda i: (0, 0, 0)),
            pl.BlockSpec(b_pack.shape, lambda i: (0, 0, 0)),
        ],
        out_specs=(
            pl.BlockSpec((row_tile, OUTPUT_DIM), lambda i: (i, 0)),
            pl.BlockSpec((row_tile, OUTPUT_DIM), lambda i: (i, 0)),
        ),
        compiler_params=pltpu.CompilerParams(dimension_semantics=("parallel",)),
        cost_estimate=pl.CostEstimate(flops=flops, transcendentals=transcendentals,
                                      bytes_accessed=bytes_accessed),
    )(x1, x2, w_pack, b_pack)
    return out1, out2


# --------------------------- parameter construction -------------------------
def _calculate_gain(activation):
    if activation == "relu":
        return math.sqrt(2.0)
    if activation == "tanh":
        return 5.0 / 3.0
    return 1.0  # sigmoid


def init_params(key):
    """xavier_uniform(gain=calculate_gain(activation)), bias = 0; packed & 128-padded.

    Returns:
      w_pack_bf16: (L, 128, 128) bf16, layer l weight at [l, :in_d, :out_d], rest 0
      b_pack     : (L, 1, 128)   f32,  layer l bias   at [l, 0, :out_d],     rest 0
      w_pack_f32 : f32 copy of the packed weights (for the full-precision reference)
    Zero padding is exact: padded weight rows/cols contribute 0 and padded output
    lanes are never read back.
    """
    gain = _calculate_gain(ACTIVATION)
    w_pack = jnp.zeros((N_LAYERS, D_PAD, D_PAD), jnp.float32)
    b_pack = jnp.zeros((N_LAYERS, 1, D_PAD), jnp.float32)
    for l, (fan_in, fan_out) in enumerate(zip(LAYER_DIMS[:-1], LAYER_DIMS[1:])):
        key, sub = jax.random.split(key)
        bound = gain * math.sqrt(6.0 / (fan_in + fan_out))
        w = jax.random.uniform(sub, (fan_in, fan_out), jnp.float32, -bound, bound)
        w_pack = w_pack.at[l, :fan_in, :fan_out].set(w)
        # biases stay zero (layer.bias.data.fill_(0.0))
    return w_pack.astype(jnp.bfloat16), b_pack, w_pack


# ----------------------------- references (JAX) -------------------------------
def _forward_once_ref(x, w_pack_bf16, b_pack):
    """Mirrors the kernel's bf16-operand / f32-accumulate numerics."""
    h = x
    for l in range(N_LAYERS):
        in_d, out_d = LAYER_DIMS[l], LAYER_DIMS[l + 1]
        hb = h.astype(jnp.bfloat16)
        h = jnp.dot(hb, w_pack_bf16[l, :in_d, :out_d],
                    preferred_element_type=jnp.float32) + b_pack[l, 0, :out_d]
        h = _activation(h)
    return h


def _forward_once_ref_f32(x, w_pack_f32, b_pack):
    """Full-f32 math (equivalent to the PyTorch module) — loose drift check."""
    h = x
    for l in range(N_LAYERS):
        in_d, out_d = LAYER_DIMS[l], LAYER_DIMS[l + 1]
        h = h @ w_pack_f32[l, :in_d, :out_d] + b_pack[l, 0, :out_d]
        h = _activation(h)
    return h


if __name__ == "__main__":
    key = jax.random.PRNGKey(0)
    key, k1, k2 = jax.random.split(key, 3)
    w_pack, b_pack, w_pack_f32 = init_params(key)

    input1 = jax.random.normal(k1, (BATCH, INPUT_DIM), jnp.float32)
    input2 = jax.random.normal(k2, (BATCH, INPUT_DIM), jnp.float32)

    out1, out2 = siamese_forward(input1, input2, w_pack, b_pack)
    jax.block_until_ready((out1, out2))

    assert out1.shape == (BATCH, OUTPUT_DIM) and out2.shape == (BATCH, OUTPUT_DIM)

    # Tight check vs a reference that mirrors the kernel's bf16/f32 numerics.
    ref1 = _forward_once_ref(input1, w_pack, b_pack)
    ref2 = _forward_once_ref(input2, w_pack, b_pack)
    assert jnp.allclose(out1, ref1, atol=2e-3, rtol=2e-3), "branch 1 mismatch (bf16 ref)"
    assert jnp.allclose(out2, ref2, atol=2e-3, rtol=2e-3), "branch 2 mismatch (bf16 ref)"

    # Loose check vs the true f32 model math (guards against gross bf16 drift).
    reff1 = _forward_once_ref_f32(input1, w_pack_f32, b_pack)
    reff2 = _forward_once_ref_f32(input2, w_pack_f32, b_pack)
    assert jnp.allclose(out1, reff1, atol=5e-2, rtol=5e-2), "branch 1 drift vs f32 model"
    assert jnp.allclose(out2, reff2, atol=5e-2, rtol=5e-2), "branch 2 drift vs f32 model"

    print("KERNEL_OK")
</pallas_src>

<mosaic_0001>
module attributes {stable_mosaic.version = 11 : i64} {
  func.func @_siamese_mlp_kernel(%arg0: i32, %arg1: memref<2x40xf32, #tpu.memory_space<vmem>>, %arg2: memref<2x40xf32, #tpu.memory_space<vmem>>, %arg3: memref<4x128x128xbf16, #tpu.memory_space<vmem>>, %arg4: memref<4x1x128xf32, #tpu.memory_space<vmem>>, %arg5: memref<2x16xf32, #tpu.memory_space<vmem>>, %arg6: memref<2x16xf32, #tpu.memory_space<vmem>>) attributes {dimension_semantics = [#tpu.dimension_semantics<parallel>], iteration_bounds = array<i64: 1>, scalar_prefetch = 0 : i64, scratch_operands = 0 : i64, tpu.core_type = #tpu.core_type<tc>, window_params = [{transform_indices = @transform_0, window_bounds = array<i64: 2, 40>}, {transform_indices = @transform_1, window_bounds = array<i64: 2, 40>}, {pipeline_mode = #tpu.pipeline_mode<synchronous>, transform_indices = @transform_2, window_bounds = array<i64: 4, 128, 128>}, {pipeline_mode = #tpu.pipeline_mode<synchronous>, transform_indices = @transform_3, window_bounds = array<i64: 4, 1, 128>}, {transform_indices = @transform_4, window_bounds = array<i64: 2, 16>}, {transform_indices = @transform_5, window_bounds = array<i64: 2, 16>}]} {
    %c0 = arith.constant 0 : index
    %c0_0 = arith.constant 0 : index
    %0 = vector.load %arg1[%c0, %c0_0] : memref<2x40xf32, #tpu.memory_space<vmem>>, vector<2x40xf32>
    %1 = arith.truncf %0 : vector<2x40xf32> to vector<2x40xbf16>
    %c0_1 = arith.constant 0 : index
    %c0_2 = arith.constant 0 : index
    %c0_3 = arith.constant 0 : index
    %2 = vector.load %arg3[%c0_1, %c0_2, %c0_3] : memref<4x128x128xbf16, #tpu.memory_space<vmem>>, vector<1x40x128xbf16>
    %3 = vector.shape_cast %2 : vector<1x40x128xbf16> to vector<40x128xbf16>
    %cst = arith.constant dense<0.000000e+00> : vector<2x128xf32>
    %4 = tpu.matmul %1, %3, %cst {dimension_numbers = #tpu.dot_dimension_numbers<[1], [0], [0], [1], [0, 0, 1, 1], [], []>} : vector<2x40xbf16>, vector<40x128xbf16>, vector<2x128xf32> -> vector<2x128xf32>
    %c0_4 = arith.constant 0 : index
    %c0_5 = arith.constant 0 : index
    %c0_6 = arith.constant 0 : index
    %5 = vector.load %arg4[%c0_4, %c0_5, %c0_6] : memref<4x1x128xf32, #tpu.memory_space<vmem>>, vector<1x1x128xf32>
    %6 = vector.shape_cast %5 : vector<1x1x128xf32> to vector<1x128xf32>
    %7 = vector.broadcast %6 : vector<1x128xf32> to vector<2x128xf32>
    %8 = arith.addf %4, %7 : vector<2x128xf32>
    %cst_7 = arith.constant 0.000000e+00 : f32
    %9 = vector.broadcast %cst_7 : f32 to vector<2x128xf32>
    %10 = arith.maximumf %8, %9 : vector<2x128xf32>
    %11 = arith.truncf %10 : vector<2x128xf32> to vector<2x128xbf16>
    %c1 = arith.constant 1 : index
    %c0_8 = arith.constant 0 : index
    %c0_9 = arith.constant 0 : index
    %12 = vector.load %arg3[%c1, %c0_8, %c0_9] : memref<4x128x128xbf16, #tpu.memory_space<vmem>>, vector<1x128x128xbf16>
    %13 = vector.shape_cast %12 : vector<1x128x128xbf16> to vector<128x128xbf16>
    %cst_10 = arith.constant dense<0.000000e+00> : vector<2x128xf32>
    %14 = tpu.matmul %11, %13, %cst_10 {dimension_numbers = #tpu.dot_dimension_numbers<[1], [0], [0], [1], [0, 0, 1, 1], [], []>} : vector<2x128xbf16>, vector<128x128xbf16>, vector<2x128xf32> -> vector<2x128xf32>
    %c1_11 = arith.constant 1 : index
    %c0_12 = arith.constant 0 : index
    %c0_13 = arith.constant 0 : index
    %15 = vector.load %arg4[%c1_11, %c0_12, %c0_13] : memref<4x1x128xf32, #tpu.memory_space<vmem>>, vector<1x1x128xf32>
    %16 = vector.shape_cast %15 : vector<1x1x128xf32> to vector<1x128xf32>
    %17 = vector.broadcast %16 : vector<1x128xf32> to vector<2x128xf32>
    %18 = arith.addf %14, %17 : vector<2x128xf32>
    %cst_14 = arith.constant 0.000000e+00 : f32
    %19 = vector.broadcast %cst_14 : f32 to vector<2x128xf32>
    %20 = arith.maximumf %18, %19 : vector<2x128xf32>
    %21 = arith.truncf %20 : vector<2x128xf32> to vector<2x128xbf16>
    %c2 = arith.constant 2 : index
    %c0_15 = arith.constant 0 : index
    %c0_16 = arith.constant 0 : index
    %22 = vector.load %arg3[%c2, %c0_15, %c0_16] : memref<4x128x128xbf16, #tpu.memory_space<vmem>>, vector<1x128x128xbf16>
    %23 = vector.shape_cast %22 : vector<1x128x128xbf16> to vector<128x128xbf16>
    %cst_17 = arith.constant dense<0.000000e+00> : vector<2x128xf32>
    %24 = tpu.matmul %21, %23, %cst_17 {dimension_numbers = #tpu.dot_dimension_numbers<[1], [0], [0], [1], [0, 0, 1, 1], [], []>} : vector<2x128xbf16>, vector<128x128xbf16>, vector<2x128xf32> -> vector<2x128xf32>
    %c2_18 = arith.constant 2 : index
    %c0_19 = arith.constant 0 : index
    %c0_20 = arith.constant 0 : index
    %25 = vector.load %arg4[%c2_18, %c0_19, %c0_20] : memref<4x1x128xf32, #tpu.memory_space<vmem>>, vector<1x1x128xf32>
    %26 = vector.shape_cast %25 : vector<1x1x128xf32> to vector<1x128xf32>
    %27 = vector.broadcast %26 : vector<1x128xf32> to vector<2x128xf32>
    %28 = arith.addf %24, %27 : vector<2x128xf32>
    %cst_21 = arith.constant 0.000000e+00 : f32
    %29 = vector.broadcast %cst_21 : f32 to vector<2x128xf32>
    %30 = arith.maximumf %28, %29 : vector<2x128xf32>
    %31 = arith.truncf %30 : vector<2x128xf32> to vector<2x128xbf16>
    %c3 = arith.constant 3 : index
    %c0_22 = arith.constant 0 : index
    %c0_23 = arith.constant 0 : index
    %32 = vector.load %arg3[%c3, %c0_22, %c0_23] : memref<4x128x128xbf16, #tpu.memory_space<vmem>>, vector<1x128x128xbf16>
    %33 = vector.shape_cast %32 : vector<1x128x128xbf16> to vector<128x128xbf16>
    %cst_24 = arith.constant dense<0.000000e+00> : vector<2x128xf32>
    %34 = tpu.matmul %31, %33, %cst_24 {dimension_numbers = #tpu.dot_dimension_numbers<[1], [0], [0], [1], [0, 0, 1, 1], [], []>} : vector<2x128xbf16>, vector<128x128xbf16>, vector<2x128xf32> -> vector<2x128xf32>
    %c3_25 = arith.constant 3 : index
    %c0_26 = arith.constant 0 : index
    %c0_27 = arith.constant 0 : index
    %35 = vector.load %arg4[%c3_25, %c0_26, %c0_27] : memref<4x1x128xf32, #tpu.memory_space<vmem>>, vector<1x1x128xf32>
    %36 = vector.shape_cast %35 : vector<1x1x128xf32> to vector<1x128xf32>
    %37 = vector.broadcast %36 : vector<1x128xf32> to vector<2x128xf32>
    %38 = arith.addf %34, %37 : vector<2x128xf32>
    %cst_28 = arith.constant 0.000000e+00 : f32
    %39 = vector.broadcast %cst_28 : f32 to vector<2x128xf32>
    %40 = arith.maximumf %38, %39 : vector<2x128xf32>
    %41 = vector.extract_strided_slice %40 {offsets = [0, 0], sizes = [2, 16], strides = [1, 1]} : vector<2x128xf32> to vector<2x16xf32>
    %c0_29 = arith.constant 0 : index
    %c0_30 = arith.constant 0 : index
    %42 = vector.load %arg5[%c0_29, %c0_30] : memref<2x16xf32, #tpu.memory_space<vmem>>, vector<2x16xf32>
    tpu.vector_store %arg5[%c0_29, %c0_30], %41 {strides = array<i32>} : memref<2x16xf32, #tpu.memory_space<vmem>>, vector<2x16xf32>,
    %c0_31 = arith.constant 0 : index
    %c0_32 = arith.constant 0 : index
    %43 = vector.load %arg2[%c0_31, %c0_32] : memref<2x40xf32, #tpu.memory_space<vmem>>, vector<2x40xf32>
    %44 = arith.truncf %43 : vector<2x40xf32> to vector<2x40xbf16>
    %c0_33 = arith.constant 0 : index
    %c0_34 = arith.constant 0 : index
    %c0_35 = arith.constant 0 : index
    %45 = vector.load %arg3[%c0_33, %c0_34, %c0_35] : memref<4x128x128xbf16, #tpu.memory_space<vmem>>, vector<1x40x128xbf16>
    %46 = vector.shape_cast %45 : vector<1x40x128xbf16> to vector<40x128xbf16>
    %cst_36 = arith.constant dense<0.000000e+00> : vector<2x128xf32>
    %47 = tpu.matmul %44, %46, %cst_36 {dimension_numbers = #tpu.dot_dimension_numbers<[1], [0], [0], [1], [0, 0, 1, 1], [], []>} : vector<2x40xbf16>, vector<40x128xbf16>, vector<2x128xf32> -> vector<2x128xf32>
    %c0_37 = arith.constant 0 : index
    %c0_38 = arith.constant 0 : index
    %c0_39 = arith.constant 0 : index
    %48 = vector.load %arg4[%c0_37, %c0_38, %c0_39] : memref<4x1x128xf32, #tpu.memory_space<vmem>>, vector<1x1x128xf32>
    %49 = vector.shape_cast %48 : vector<1x1x128xf32> to vector<1x128xf32>
    %50 = vector.broadcast %49 : vector<1x128xf32> to vector<2x128xf32>
    %51 = arith.addf %47, %50 : vector<2x128xf32>
    %cst_40 = arith.constant 0.000000e+00 : f32
    %52 = vector.broadcast %cst_40 : f32 to vector<2x128xf32>
    %53 = arith.maximumf %51, %52 : vector<2x128xf32>
    %54 = arith.truncf %53 : vector<2x128xf32> to vector<2x128xbf16>
    %c1_41 = arith.constant 1 : index
    %c0_42 = arith.constant 0 : index
    %c0_43 = arith.constant 0 : index
    %55 = vector.load %arg3[%c1_41, %c0_42, %c0_43] : memref<4x128x128xbf16, #tpu.memory_space<vmem>>, vector<1x128x128xbf16>
    %56 = vector.shape_cast %55 : vector<1x128x128xbf16> to vector<128x128xbf16>
    %cst_44 = arith.constant dense<0.000000e+00> : vector<2x128xf32>
    %57 = tpu.matmul %54, %56, %cst_44 {dimension_numbers = #tpu.dot_dimension_numbers<[1], [0], [0], [1], [0, 0, 1, 1], [], []>} : vector<2x128xbf16>, vector<128x128xbf16>, vector<2x128xf32> -> vector<2x128xf32>
    %c1_45 = arith.constant 1 : index
    %c0_46 = arith.constant 0 : index
    %c0_47 = arith.constant 0 : index
    %58 = vector.load %arg4[%c1_45, %c0_46, %c0_47] : memref<4x1x128xf32, #tpu.memory_space<vmem>>, vector<1x1x128xf32>
    %59 = vector.shape_cast %58 : vector<1x1x128xf32> to vector<1x128xf32>
    %60 = vector.broadcast %59 : vector<1x128xf32> to vector<2x128xf32>
    %61 = arith.addf %57, %60 : vector<2x128xf32>
    %cst_48 = arith.constant 0.000000e+00 : f32
    %62 = vector.broadcast %cst_48 : f32 to vector<2x128xf32>
    %63 = arith.maximumf %61, %62 : vector<2x128xf32>
    %64 = arith.truncf %63 : vector<2x128xf32> to vector<2x128xbf16>
    %c2_49 = arith.constant 2 : index
    %c0_50 = arith.constant 0 : index
    %c0_51 = arith.constant 0 : index
    %65 = vector.load %arg3[%c2_49, %c0_50, %c0_51] : memref<4x128x128xbf16, #tpu.memory_space<vmem>>, vector<1x128x128xbf16>
    %66 = vector.shape_cast %65 : vector<1x128x128xbf16> to vector<128x128xbf16>
    %cst_52 = arith.constant dense<0.000000e+00> : vector<2x128xf32>
    %67 = tpu.matmul %64, %66, %cst_52 {dimension_numbers = #tpu.dot_dimension_numbers<[1], [0], [0], [1], [0, 0, 1, 1], [], []>} : vector<2x128xbf16>, vector<128x128xbf16>, vector<2x128xf32> -> vector<2x128xf32>
    %c2_53 = arith.constant 2 : index
    %c0_54 = arith.constant 0 : index
    %c0_55 = arith.constant 0 : index
    %68 = vector.load %arg4[%c2_53, %c0_54, %c0_55] : memref<4x1x128xf32, #tpu.memory_space<vmem>>, vector<1x1x128xf32>
    %69 = vector.shape_cast %68 : vector<1x1x128xf32> to vector<1x128xf32>
    %70 = vector.broadcast %69 : vector<1x128xf32> to vector<2x128xf32>
    %71 = arith.addf %67, %70 : vector<2x128xf32>
    %cst_56 = arith.constant 0.000000e+00 : f32
    %72 = vector.broadcast %cst_56 : f32 to vector<2x128xf32>
    %73 = arith.maximumf %71, %72 : vector<2x128xf32>
    %74 = arith.truncf %73 : vector<2x128xf32> to vector<2x128xbf16>
    %c3_57 = arith.constant 3 : index
    %c0_58 = arith.constant 0 : index
    %c0_59 = arith.constant 0 : index
    %75 = vector.load %arg3[%c3_57, %c0_58, %c0_59] : memref<4x128x128xbf16, #tpu.memory_space<vmem>>, vector<1x128x128xbf16>
    %76 = vector.shape_cast %75 : vector<1x128x128xbf16> to vector<128x128xbf16>
    %cst_60 = arith.constant dense<0.000000e+00> : vector<2x128xf32>
    %77 = tpu.matmul %74, %76, %cst_60 {dimension_numbers = #tpu.dot_dimension_numbers<[1], [0], [0], [1], [0, 0, 1, 1], [], []>} : vector<2x128xbf16>, vector<128x128xbf16>, vector<2x128xf32> -> vector<2x128xf32>
    %c3_61 = arith.constant 3 : index
    %c0_62 = arith.constant 0 : index
    %c0_63 = arith.constant 0 : index
    %78 = vector.load %arg4[%c3_61, %c0_62, %c0_63] : memref<4x1x128xf32, #tpu.memory_space<vmem>>, vector<1x1x128xf32>
    %79 = vector.shape_cast %78 : vector<1x1x128xf32> to vector<1x128xf32>
    %80 = vector.broadcast %79 : vector<1x128xf32> to vector<2x128xf32>
    %81 = arith.addf %77, %80 : vector<2x128xf32>
    %cst_64 = arith.constant 0.000000e+00 : f32
    %82 = vector.broadcast %cst_64 : f32 to vector<2x128xf32>
    %83 = arith.maximumf %81, %82 : vector<2x128xf32>
    %84 = vector.extract_strided_slice %83 {offsets = [0, 0], sizes = [2, 16], strides = [1, 1]} : vector<2x128xf32> to vector<2x16xf32>
    %c0_65 = arith.constant 0 : index
    %c0_66 = arith.constant 0 : index
    %85 = vector.load %arg6[%c0_65, %c0_66] : memref<2x16xf32, #tpu.memory_space<vmem>>, vector<2x16xf32>
    tpu.vector_store %arg6[%c0_65, %c0_66], %84 {strides = array<i32>} : memref<2x16xf32, #tpu.memory_space<vmem>>, vector<2x16xf32>,
    return
  }
  func.func @transform_0(%arg0: i32) -> (i32, i32) {
    %c0_i32 = arith.constant 0 : i32
    %c0_i32_0 = arith.constant 0 : i32
    return %arg0, %c0_i32 : i32, i32
  }
  func.func @transform_1(%arg0: i32) -> (i32, i32) {
    %c0_i32 = arith.constant 0 : i32
    %c0_i32_0 = arith.constant 0 : i32
    return %arg0, %c0_i32 : i32, i32
  }
  func.func @transform_2(%arg0: i32) -> (i32, i32, i32) {
    %c0_i32 = arith.constant 0 : i32
    %c0_i32_0 = arith.constant 0 : i32
    %c0_i32_1 = arith.constant 0 : i32
    %c0_i32_2 = arith.constant 0 : i32
    return %c0_i32, %c0_i32_0, %c0_i32_1 : i32, i32, i32
  }
  func.func @transform_3(%arg0: i32) -> (i32, i32, i32) {
    %c0_i32 = arith.constant 0 : i32
    %c0_i32_0 = arith.constant 0 : i32
    %c0_i32_1 = arith.constant 0 : i32
    %c0_i32_2 = arith.constant 0 : i32
    return %c0_i32, %c0_i32_0, %c0_i32_1 : i32, i32, i32
  }
  func.func @transform_4(%arg0: i32) -> (i32, i32) {
    %c0_i32 = arith.constant 0 : i32
    %c0_i32_0 = arith.constant 0 : i32
    return %arg0, %c0_i32 : i32, i32
  }
  func.func @transform_5(%arg0: i32) -> (i32, i32) {
    %c0_i32 = arith.constant 0 : i32
    %c0_i32_0 = arith.constant 0 : i32
    return %arg0, %c0_i32 : i32, i32
  }
}

</mosaic_0001>

<llo_original>
// kernel: tpu_custom_call.1
$region0: #{tpu_custom_call.1}
  #allocation0 [shape = 'u32[]', space=smem, size = 0x4, offset = 0x4, fixed_abs, tag = 'smem constant byte address 0x4 - core index']
  #allocation1 [shape = 'u32[144,128]{1,0:T(1,128)}', space=vmem, size = 0x12000, scoped, tag = 'internal scratch']
  %s0 = inlined_call_operand.hbm [shape: f32[2,40], index: 0, kind: input, shape index: {}]
  %s1 = inlined_call_operand.vmem [shape: f32[2,40], index: 1, kind: input, shape index: {}]
  %s2 = inlined_call_operand.hbm [shape: bf16[4,128,128], index: 2, kind: input, shape index: {}]
  %s3 = inlined_call_operand.vmem [shape: f32[4,1,128], index: 3, kind: input, shape index: {}]
  %s4 = inlined_call_operand.hbm [shape: f32[2,16], index: 4, kind: output, shape index: {0}]
  %s5 = inlined_call_operand.hbm [shape: f32[2,16], index: 5, kind: output, shape index: {1}]
  %6 = xla_tuple %s4, %s5
  %s7 = sld [smem:[#allocation0]]
  $region42: #{tpu_custom_call.1} parent=0
    _
  %s9 = ssub.s32 1, %s7
  %s10 = scalar_select 0, %s9, %s7
  $region1: #{tpu_custom_call.1} parent=0
    #allocation2 [shape = 'u8[1024]{0}', space=vmem, size = 0x400, scoped, tag = 'input window, operand 0, single buffered']
    #allocation3 [shape = 's32[1]{0}', space=sflag, size = 0x4, scoped, tag = 'scoped memory for tpu_custom_call.1']
    #allocation4 [shape = 's32[1]{0}', space=sflag, size = 0x4, scoped, tag = 'scoped memory for tpu_custom_call.1']
    #allocation5 [shape = 'u8[131072]{0}', space=vmem, size = 0x20000, scoped, tag = 'input window, operand 2, single buffered']
    #allocation6 [shape = 's32[1]{0}', space=sflag, size = 0x4, scoped, tag = 'scoped memory for tpu_custom_call.1']
    #allocation7 [shape = 'u8[1024]{0}', space=vmem, size = 0x400, scoped, tag = 'output window, operand 0, single buffered']
    #allocation8 [shape = 'u8[1024]{0}', space=vmem, size = 0x400, scoped, tag = 'output window, operand 1, single buffered']
    #allocation9 [shape = 's32[1]{0}', space=sflag, size = 0x4, scoped, tag = 'scoped memory for tpu_custom_call.1']
    %11 = vsyncpa [#allocation3], 0
    %12 = vsyncpa [#allocation6], 0
    %13 = vsyncpa [#allocation4], 0
    %14 = vsyncpa [#allocation9], 0
    // Predicated region
    $region2: #{tpu_custom_call.1} parent=1 // pred_check
      _
    $region3: #{tpu_custom_call.1} parent=1 // pred_check_branch
      %16 = sbr.rel (0) target = $region5
    $region4: #{tpu_custom_call.1} parent=1 // pred_region
      %s18 = ssub.s32 32, 32
      %19 = vsyncadd [#allocation3], %s18
      %s21 = sshll.u32 [#allocation2], 4
      %s22 = int_to_ptr.vmem [resolvable:$true] %s21
      %24 = dma.hbm_to_vmem [thread:$0]  %s0, 32, %s22, [#allocation3]
    $region5: #{tpu_custom_call.1} parent=1 // pred_fallthru
      _
    // Predicated region
    $region6: #{tpu_custom_call.1} parent=1 // pred_check
      _
    $region7: #{tpu_custom_call.1} parent=1 // pred_check_branch
      %26 = sbr.rel (0) target = $region9
    $region8: #{tpu_custom_call.1} parent=1 // pred_region
      _
    $region9: #{tpu_custom_call.1} parent=1 // pred_fallthru
      _
    // Predicated region
    $region10: #{tpu_custom_call.1} parent=1 // pred_check
      _
    $region11: #{tpu_custom_call.1} parent=1 // pred_check_branch
      %28 = sbr.rel (0) target = $region13
    $region12: #{tpu_custom_call.1} parent=1 // pred_region
      %s30 = ssub.s32 4096, 4096
      %31 = vsyncadd [#allocation6], %s30
      %s32 = sshll.u32 [#allocation5], 4
      %s33 = int_to_ptr.vmem [resolvable:$true] %s32
      %38 = dma.hbm_to_vmem [thread:$0]  %s2, 4096, %s33, [#allocation6], 64, 64, 4
    $region13: #{tpu_custom_call.1} parent=1 // pred_fallthru
      _
    // Predicated region
    $region14: #{tpu_custom_call.1} parent=1 // pred_check
      _
    $region15: #{tpu_custom_call.1} parent=1 // pred_check_branch
      %40 = sbr.rel (0) target = $region17
    $region16: #{tpu_custom_call.1} parent=1 // pred_region
      _
    $region17: #{tpu_custom_call.1} parent=1 // pred_fallthru
      _
    // Predicated region
    $region18: #{tpu_custom_call.1} parent=1 // pred_check
      _
    $region19: #{tpu_custom_call.1} parent=1 // pred_check_branch
      %42 = sbr.rel (0) target = $region21
    $region20: #{tpu_custom_call.1} parent=1 // pred_region
      %43 = dma.done [#allocation3], 32
    $region21: #{tpu_custom_call.1} parent=1 // pred_fallthru
      _
    // Predicated region
    $region22: #{tpu_custom_call.1} parent=1 // pred_check
      _
    $region23: #{tpu_custom_call.1} parent=1 // pred_check_branch
      %45 = sbr.rel (0) target = $region25
    $region24: #{tpu_custom_call.1} parent=1 // pred_region
      %46 = dma.done [#allocation6], 4096
    $region25: #{tpu_custom_call.1} parent=1 // pred_fallthru
      _
    %v48 = vld [vmem:[#allocation2] sm:$0x3]
    %v49 = vpack.c.bf16 %v48, %v48
    %v50 = vld [vmem:[#allocation5] sm:$0xf]
    %v51 = vld [vmem:[#allocation5 + $0x4] sm:$0xf]
    %v52 = vld [vmem:[#allocation5 + $0x8] sm:$0xf]
    %v53 = vld [vmem:[#allocation5 + $0xc] sm:$0xf]
    %v54 = vld [vmem:[#allocation5 + $0x10] sm:$0xf]
    %v55 = vld [vmem:[%s3] sm:$0x1]
    %v57 = vlaneseq
    %v58 = vshrl.u32 %v57, 7
    %v59 = vsub.s32 0, %v58
    %v60 = vrot.slane %v55, %v59
    %v67 = vunpack.c.l.b16 %v50
    %v68 = vunpack.c.l.b16 %v51
    %v69 = vunpack.c.l.b16 %v52
    %v70 = vunpack.c.l.b16 %v53
    %v71 = vunpack.c.l.b16 %v54
    %v72 = vpack.c.b16 %v68, %v67
    %v73 = vpack.c.b16 %v70, %v69
    %v74 = vpack.c.b16 %v71, %v71
    %vm77 = vcmask 326656
    %v79 = vsel %vm77, %v49, 0
    %vm81 = vcmask 1043456
    %v83 = vsel %vm81, %v74, 0
    %85 = vmatprep.subr.bf16.mxu0 0
    %86 = vmatpush1.bf16.msra.mxu0 %v72
    %87 = vmatprep.subr.bf16.mxu0 0
    %88 = vmatpush1.bf16.msra.mxu0 %v73
    %89 = vmatprep.subr.bf16.mxu0 0
    %90 = vmatpush1.bf16.msra.mxu0 %v83
    %91 = vmatprep.subr.bf16.mxu0 0
    %92 = vmatpush1.bf16.msra.mxu0 0
    %93 = vmatprep.subr.bf16.mxu0 0
    %94 = vmatpush1.bf16.msra.mxu0 0
    %95 = vmatprep.subr.bf16.mxu0 0
    %96 = vmatpush1.bf16.msra.mxu0 0
    %97 = vmatprep.subr.bf16.mxu0 0
    %98 = vmatpush1.bf16.msra.mxu0 0
    %99 = vmatprep.subr.bf16.mxu0 0
    %100 = vmatpush1.bf16.msra.mxu0 0
    %101 = vmatprep.subr.bf16.mxu0 0
    %102 = vmatpush1.bf16.msra.mxu0 0
    %103 = vmatprep.subr.bf16.mxu0 0
    %104 = vmatpush1.bf16.msra.mxu0 0
    %105 = vmatprep.subr.bf16.mxu0 0
    %106 = vmatpush1.bf16.msra.mxu0 0
    %107 = vmatprep.subr.bf16.mxu0 0
    %108 = vmatpush1.bf16.msra.mxu0 0
    %109 = vmatprep.subr.bf16.mxu0 0
    %110 = vmatpush1.bf16.msra.mxu0 0
    %111 = vmatprep.subr.bf16.mxu0 0
    %112 = vmatpush1.bf16.msra.mxu0 0
    %113 = vmatprep.subr.bf16.mxu0 0
    %114 = vmatpush1.bf16.msra.mxu0 0
    %115 = vmatprep.subr.bf16.mxu0 0
    %116 = vmatpush1.bf16.msra.mxu0 0
    %117 = vmatprep.mubr.bf16.mxu0 0
    %118 = vmatmul.mubr.bf16.gmra.mrb[0].mxu0 %v79
    %v119 = vpop.f32.mrb[0].mxu0
    %v120 = vadd.f32 %v60, %v119
    %v121 = vpop.f32.mrb[0].mxu0
    %v122 = vpop.f32.mrb[0].mxu0
    %v123 = vpop.f32.mrb[0].mxu0
    %124 = vdwg.mxu0
    %v125 = vmax.f32 %v120, 0.0
    %v126 = vpack.c.bf16 %v125, %v125
    %s127 = scalar_lea.vmem [#allocation5], 64
    %v128 = vld [vmem:[%s127] sm:$0xf]
    %v129 = vld [vmem:[%s127 + $0x4] sm:$0xf]
    %v130 = vld [vmem:[%s127 + $0x8] sm:$0xf]
    %v131 = vld [vmem:[%s127 + $0xc] sm:$0xf]
    %v132 = vld [vmem:[%s127 + $0x10] sm:$0xf]
    %v133 = vld [vmem:[%s127 + $0x14] sm:$0xf]
    %v134 = vld [vmem:[%s127 + $0x18] sm:$0xf]
    %v135 = vld [vmem:[%s127 + $0x1c] sm:$0xf]
    %v136 = vld [vmem:[%s127 + $0x20] sm:$0xf]
    %v137 = vld [vmem:[%s127 + $0x24] sm:$0xf]
    %v138 = vld [vmem:[%s127 + $0x28] sm:$0xf]
    %v139 = vld [vmem:[%s127 + $0x2c] sm:$0xf]
    %v140 = vld [vmem:[%s127 + $0x30] sm:$0xf]
    %v141 = vld [vmem:[%s127 + $0x34] sm:$0xf]
    %v142 = vld [vmem:[%s127 + $0x38] sm:$0xf]
    %v143 = vld [vmem:[%s127 + $0x3c] sm:$0xf]
    %s144 = scalar_lea.vmem %s3, 1
    %v145 = vld [vmem:[%s144] sm:$0x1]
    %v147 = vlaneseq
    %v148 = vshrl.u32 %v147, 7
    %v149 = vsub.s32 0, %v148
    %v150 = vrot.slane %v145, %v149
    %v168 = vunpack.c.l.b16 %v128
    %v169 = vunpack.c.l.b16 %v129
    %v170 = vunpack.c.l.b16 %v130
    %v171 = vunpack.c.l.b16 %v131
    %v172 = vunpack.c.l.b16 %v132
    %v173 = vunpack.c.l.b16 %v133
    %v174 = vunpack.c.l.b16 %v134
    %v175 = vunpack.c.l.b16 %v135
    %v176 = vunpack.c.l.b16 %v136
    %v177 = vunpack.c.l.b16 %v137
    %v178 = vunpack.c.l.b16 %v138
    %v179 = vunpack.c.l.b16 %v139
    %v180 = vunpack.c.l.b16 %v140
    %v181 = vunpack.c.l.b16 %v141
    %v182 = vunpack.c.l.b16 %v142
    %v183 = vunpack.c.l.b16 %v143
    %v184 = vpack.c.b16 %v169, %v168
    %v185 = vpack.c.b16 %v171, %v170
    %v186 = vpack.c.b16 %v173, %v172
    %v187 = vpack.c.b16 %v175, %v174
    %v188 = vpack.c.b16 %v177, %v176
    %v189 = vpack.c.b16 %v179, %v178
    %v190 = vpack.c.b16 %v181, %v180
    %v191 = vpack.c.b16 %v183, %v182
    %200 = vmatprep.subr.bf16.mxu0 0
    %201 = vmatpush1.bf16.msra.mxu0 %v184
    %202 = vmatprep.subr.bf16.mxu0 0
    %203 = vmatpush1.bf16.msra.mxu0 %v185
    %204 = vmatprep.subr.bf16.mxu0 0
    %205 = vmatpush1.bf16.msra.mxu0 %v186
    %206 = vmatprep.subr.bf16.mxu0 0
    %207 = vmatpush1.bf16.msra.mxu0 %v187
    %208 = vmatprep.subr.bf16.mxu0 0
    %209 = vmatpush1.bf16.msra.mxu0 %v188
    %210 = vmatprep.subr.bf16.mxu0 0
    %211 = vmatpush1.bf16.msra.mxu0 %v189
    %212 = vmatprep.subr.bf16.mxu0 0
    %213 = vmatpush1.bf16.msra.mxu0 %v190
    %214 = vmatprep.subr.bf16.mxu0 0
    %215 = vmatpush1.bf16.msra.mxu0 %v191
    %216 = vmatprep.subr.bf16.mxu0 0
    %217 = vmatpush1.bf16.msra.mxu0 0
    %218 = vmatprep.subr.bf16.mxu0 0
    %219 = vmatpush1.bf16.msra.mxu0 0
    %220 = vmatprep.subr.bf16.mxu0 0
    %221 = vmatpush1.bf16.msra.mxu0 0
    %222 = vmatprep.subr.bf16.mxu0 0
    %223 = vmatpush1.bf16.msra.mxu0 0
    %224 = vmatprep.subr.bf16.mxu0 0
    %225 = vmatpush1.bf16.msra.mxu0 0
    %226 = vmatprep.subr.bf16.mxu0 0
    %227 = vmatpush1.bf16.msra.mxu0 0
    %228 = vmatprep.subr.bf16.mxu0 0
    %229 = vmatpush1.bf16.msra.mxu0 0
    %230 = vmatprep.subr.bf16.mxu0 0
    %231 = vmatpush1.bf16.msra.mxu0 0
    %232 = vmatprep.mubr.bf16.mxu0 0
    %233 = vmatmul.mubr.bf16.gmra.mrb[0].mxu0 %v126
    %v234 = vpop.f32.mrb[0].mxu0
    %v235 = vadd.f32 %v150, %v234
    %v236 = vpop.f32.mrb[0].mxu0
    %v237 = vpop.f32.mrb[0].mxu0
    %v238 = vpop.f32.mrb[0].mxu0
    %239 = vdwg.mxu0
    %v240 = vmax.f32 %v235, 0.0
    %v241 = vpack.c.bf16 %v240, %v240
    %s242 = scalar_lea.vmem [#allocation5], 128
    %v243 = vld [vmem:[%s242] sm:$0xf]
    %v244 = vld [vmem:[%s242 + $0x4] sm:$0xf]
    %v245 = vld [vmem:[%s242 + $0x8] sm:$0xf]
    %v246 = vld [vmem:[%s242 + $0xc] sm:$0xf]
    %v247 = vld [vmem:[%s242 + $0x10] sm:$0xf]
    %v248 = vld [vmem:[%s242 + $0x14] sm:$0xf]
    %v249 = vld [vmem:[%s242 + $0x18] sm:$0xf]
    %v250 = vld [vmem:[%s242 + $0x1c] sm:$0xf]
    %v251 = vld [vmem:[%s242 + $0x20] sm:$0xf]
    %v252 = vld [vmem:[%s242 + $0x24] sm:$0xf]
    %v253 = vld [vmem:[%s242 + $0x28] sm:$0xf]
    %v254 = vld [vmem:[%s242 + $0x2c] sm:$0xf]
    %v255 = vld [vmem:[%s242 + $0x30] sm:$0xf]
    %v256 = vld [vmem:[%s242 + $0x34] sm:$0xf]
    %v257 = vld [vmem:[%s242 + $0x38] sm:$0xf]
    %v258 = vld [vmem:[%s242 + $0x3c] sm:$0xf]
    %s259 = scalar_lea.vmem %s3, 2
    %v260 = vld [vmem:[%s259] sm:$0x1]
    %v262 = vlaneseq
    %v263 = vshrl.u32 %v262, 7
    %v264 = vsub.s32 0, %v263
    %v265 = vrot.slane %v260, %v264
    %v283 = vunpack.c.l.b16 %v243
    %v284 = vunpack.c.l.b16 %v244
    %v285 = vunpack.c.l.b16 %v245
    %v286 = vunpack.c.l.b16 %v246
    %v287 = vunpack.c.l.b16 %v247
    %v288 = vunpack.c.l.b16 %v248
    %v289 = vunpack.c.l.b16 %v249
    %v290 = vunpack.c.l.b16 %v250
    %v291 = vunpack.c.l.b16 %v251
    %v292 = vunpack.c.l.b16 %v252
    %v293 = vunpack.c.l.b16 %v253
    %v294 = vunpack.c.l.b16 %v254
    %v295 = vunpack.c.l.b16 %v255
    %v296 = vunpack.c.l.b16 %v256
    %v297 = vunpack.c.l.b16 %v257
    %v298 = vunpack.c.l.b16 %v258
    %v299 = vpack.c.b16 %v284, %v283
    %v300 = vpack.c.b16 %v286, %v285
    %v301 = vpack.c.b16 %v288, %v287
    %v302 = vpack.c.b16 %v290, %v289
    %v303 = vpack.c.b16 %v292, %v291
    %v304 = vpack.c.b16 %v294, %v293
    %v305 = vpack.c.b16 %v296, %v295
    %v306 = vpack.c.b16 %v298, %v297
    %315 = vmatprep.subr.bf16.mxu0 0
    %316 = vmatpush1.bf16.msra.mxu0 %v299
    %317 = vmatprep.subr.bf16.mxu0 0
    %318 = vmatpush1.bf16.msra.mxu0 %v300
    %319 = vmatprep.subr.bf16.mxu0 0
    %320 = vmatpush1.bf16.msra.mxu0 %v301
    %321 = vmatprep.subr.bf16.mxu0 0
    %322 = vmatpush1.bf16.msra.mxu0 %v302
    %323 = vmatprep.subr.bf16.mxu0 0
    %324 = vmatpush1.bf16.msra.mxu0 %v303
    %325 = vmatprep.subr.bf16.mxu0 0
    %326 = vmatpush1.bf16.msra.mxu0 %v304
    %327 = vmatprep.subr.bf16.mxu0 0
    %328 = vmatpush1.bf16.msra.mxu0 %v305
    %329 = vmatprep.subr.bf16.mxu0 0
    %330 = vmatpush1.bf16.msra.mxu0 %v306
    %331 = vmatprep.subr.bf16.mxu0 0
    %332 = vmatpush1.bf16.msra.mxu0 0
    %333 = vmatprep.subr.bf16.mxu0 0
    %334 = vmatpush1.bf16.msra.mxu0 0
    %335 = vmatprep.subr.bf16.mxu0 0
    %336 = vmatpush1.bf16.msra.mxu0 0
    %337 = vmatprep.subr.bf16.mxu0 0
    %338 = vmatpush1.bf16.msra.mxu0 0
    %339 = vmatprep.subr.bf16.mxu0 0
    %340 = vmatpush1.bf16.msra.mxu0 0
    %341 = vmatprep.subr.bf16.mxu0 0
    %342 = vmatpush1.bf16.msra.mxu0 0
    %343 = vmatprep.subr.bf16.mxu0 0
    %344 = vmatpush1.bf16.msra.mxu0 0
    %345 = vmatprep.subr.bf16.mxu0 0
    %346 = vmatpush1.bf16.msra.mxu0 0
    %347 = vmatprep.mubr.bf16.mxu0 0
    %348 = vmatmul.mubr.bf16.gmra.mrb[0].mxu0 %v241
    %v349 = vpop.f32.mrb[0].mxu0
    %v350 = vadd.f32 %v265, %v349
    %v351 = vpop.f32.mrb[0].mxu0
    %v352 = vpop.f32.mrb[0].mxu0
    %v353 = vpop.f32.mrb[0].mxu0
    %354 = vdwg.mxu0
    %v355 = vmax.f32 %v350, 0.0
    %v356 = vpack.c.bf16 %v355, %v355
    %s357 = scalar_lea.vmem [#allocation5], 192
    %v358 = vld [vmem:[%s357] sm:$0xf]
    %v359 = vld [vmem:[%s357 + $0x4] sm:$0xf]
    %v360 = vld [vmem:[%s357 + $0x8] sm:$0xf]
    %v361 = vld [vmem:[%s357 + $0xc] sm:$0xf]
    %v362 = vld [vmem:[%s357 + $0x10] sm:$0xf]
    %v363 = vld [vmem:[%s357 + $0x14] sm:$0xf]
    %v364 = vld [vmem:[%s357 + $0x18] sm:$0xf]
    %v365 = vld [vmem:[%s357 + $0x1c] sm:$0xf]
    %v366 = vld [vmem:[%s357 + $0x20] sm:$0xf]
    %v367 = vld [vmem:[%s357 + $0x24] sm:$0xf]
    %v368 = vld [vmem:[%s357 + $0x28] sm:$0xf]
    %v369 = vld [vmem:[%s357 + $0x2c] sm:$0xf]
    %v370 = vld [vmem:[%s357 + $0x30] sm:$0xf]
    %v371 = vld [vmem:[%s357 + $0x34] sm:$0xf]
    %v372 = vld [vmem:[%s357 + $0x38] sm:$0xf]
    %v373 = vld [vmem:[%s357 + $0x3c] sm:$0xf]
    %s374 = scalar_lea.vmem %s3, 3
    %v375 = vld [vmem:[%s374] sm:$0x1]
    %v377 = vlaneseq
    %v378 = vshrl.u32 %v377, 7
    %v379 = vsub.s32 0, %v378
    %v380 = vrot.slane %v375, %v379
    %v398 = vunpack.c.l.b16 %v358
    %v399 = vunpack.c.l.b16 %v359
    %v400 = vunpack.c.l.b16 %v360
    %v401 = vunpack.c.l.b16 %v361
    %v402 = vunpack.c.l.b16 %v362
    %v403 = vunpack.c.l.b16 %v363
    %v404 = vunpack.c.l.b16 %v364
    %v405 = vunpack.c.l.b16 %v365
    %v406 = vunpack.c.l.b16 %v366
    %v407 = vunpack.c.l.b16 %v367
    %v408 = vunpack.c.l.b16 %v368
    %v409 = vunpack.c.l.b16 %v369
    %v410 = vunpack.c.l.b16 %v370
    %v411 = vunpack.c.l.b16 %v371
    %v412 = vunpack.c.l.b16 %v372
    %v413 = vunpack.c.l.b16 %v373
    %v414 = vpack.c.b16 %v399, %v398
    %v415 = vpack.c.b16 %v401, %v400
    %v416 = vpack.c.b16 %v403, %v402
    %v417 = vpack.c.b16 %v405, %v404
    %v418 = vpack.c.b16 %v407, %v406
    %v419 = vpack.c.b16 %v409, %v408
    %v420 = vpack.c.b16 %v411, %v410
    %v421 = vpack.c.b16 %v413, %v412
    %430 = vmatprep.subr.bf16.mxu0 0
    %431 = vmatpush1.bf16.msra.mxu0 %v414
    %432 = vmatprep.subr.bf16.mxu0 0
    %433 = vmatpush1.bf16.msra.mxu0 %v415
    %434 = vmatprep.subr.bf16.mxu0 0
    %435 = vmatpush1.bf16.msra.mxu0 %v416
    %436 = vmatprep.subr.bf16.mxu0 0
    %437 = vmatpush1.bf16.msra.mxu0 %v417
    %438 = vmatprep.subr.bf16.mxu0 0
    %439 = vmatpush1.bf16.msra.mxu0 %v418
    %440 = vmatprep.subr.bf16.mxu0 0
    %441 = vmatpush1.bf16.msra.mxu0 %v419
    %442 = vmatprep.subr.bf16.mxu0 0
    %443 = vmatpush1.bf16.msra.mxu0 %v420
    %444 = vmatprep.subr.bf16.mxu0 0
    %445 = vmatpush1.bf16.msra.mxu0 %v421
    %446 = vmatprep.subr.bf16.mxu0 0
    %447 = vmatpush1.bf16.msra.mxu0 0
    %448 = vmatprep.subr.bf16.mxu0 0
    %449 = vmatpush1.bf16.msra.mxu0 0
    %450 = vmatprep.subr.bf16.mxu0 0
    %451 = vmatpush1.bf16.msra.mxu0 0
    %452 = vmatprep.subr.bf16.mxu0 0
    %453 = vmatpush1.bf16.msra.mxu0 0
    %454 = vmatprep.subr.bf16.mxu0 0
    %455 = vmatpush1.bf16.msra.mxu0 0
    %456 = vmatprep.subr.bf16.mxu0 0
    %457 = vmatpush1.bf16.msra.mxu0 0
    %458 = vmatprep.subr.bf16.mxu0 0
    %459 = vmatpush1.bf16.msra.mxu0 0
    %460 = vmatprep.subr.bf16.mxu0 0
    %461 = vmatpush1.bf16.msra.mxu0 0
    %462 = vmatprep.mubr.bf16.mxu0 0
    %463 = vmatmul.mubr.bf16.gmra.mrb[0].mxu0 %v356
    %v464 = vpop.f32.mrb[0].mxu0
    %v465 = vadd.f32 %v380, %v464
    %v466 = vpop.f32.mrb[0].mxu0
    %v467 = vpop.f32.mrb[0].mxu0
    %v468 = vpop.f32.mrb[0].mxu0
    %469 = vdwg.mxu0
    %v470 = vmax.f32 %v465, 0.0
    %vm471 = vcmask 123904
    %472 = vst.msk [vmem:[#allocation7] sm:$0x3] %vm471, %v470
    %v473 = vld [vmem:[%s1] sm:$0x3]
    %v474 = vpack.c.bf16 %v473, %v473
    %v475 = vld [vmem:[#allocation5] sm:$0xf]
    %v476 = vld [vmem:[#allocation5 + $0x4] sm:$0xf]
    %v477 = vld [vmem:[#allocation5 + $0x8] sm:$0xf]
    %v478 = vld [vmem:[#allocation5 + $0xc] sm:$0xf]
    %v479 = vld [vmem:[#allocation5 + $0x10] sm:$0xf]
    %v480 = vld [vmem:[%s3] sm:$0x1]
    %v482 = vlaneseq
    %v483 = vshrl.u32 %v482, 7
    %v484 = vsub.s32 0, %v483
    %v485 = vrot.slane %v480, %v484
    %v492 = vunpack.c.l.b16 %v475
    %v493 = vunpack.c.l.b16 %v476
    %v494 = vunpack.c.l.b16 %v477
    %v495 = vunpack.c.l.b16 %v478
    %v496 = vunpack.c.l.b16 %v479
    %v497 = vpack.c.b16 %v493, %v492
    %v498 = vpack.c.b16 %v495, %v494
    %v499 = vpack.c.b16 %v496, %v496
    %v503 = vsel %vm77, %v474, 0
    %v506 = vsel %vm81, %v499, 0
    %508 = vmatprep.subr.bf16.mxu0 0
    %509 = vmatpush1.bf16.msra.mxu0 %v497
    %510 = vmatprep.subr.bf16.mxu0 0
    %511 = vmatpush1.bf16.msra.mxu0 %v498
    %512 = vmatprep.subr.bf16.mxu0 0
    %513 = vmatpush1.bf16.msra.mxu0 %v506
    %514 = vmatprep.subr.bf16.mxu0 0
    %515 = vmatpush1.bf16.msra.mxu0 0
    %516 = vmatprep.subr.bf16.mxu0 0
    %517 = vmatpush1.bf16.msra.mxu0 0
    %518 = vmatprep.subr.bf16.mxu0 0
    %519 = vmatpush1.bf16.msra.mxu0 0
    %520 = vmatprep.subr.bf16.mxu0 0
    %521 = vmatpush1.bf16.msra.mxu0 0
    %522 = vmatprep.subr.bf16.mxu0 0
    %523 = vmatpush1.bf16.msra.mxu0 0
    %524 = vmatprep.subr.bf16.mxu0 0
    %525 = vmatpush1.bf16.msra.mxu0 0
    %526 = vmatprep.subr.bf16.mxu0 0
    %527 = vmatpush1.bf16.msra.mxu0 0
    %528 = vmatprep.subr.bf16.mxu0 0
    %529 = vmatpush1.bf16.msra.mxu0 0
    %530 = vmatprep.subr.bf16.mxu0 0
    %531 = vmatpush1.bf16.msra.mxu0 0
    %532 = vmatprep.subr.bf16.mxu0 0
    %533 = vmatpush1.bf16.msra.mxu0 0
    %534 = vmatprep.subr.bf16.mxu0 0
    %535 = vmatpush1.bf16.msra.mxu0 0
    %536 = vmatprep.subr.bf16.mxu0 0
    %537 = vmatpush1.bf16.msra.mxu0 0
    %538 = vmatprep.subr.bf16.mxu0 0
    %539 = vmatpush1.bf16.msra.mxu0 0
    %540 = vmatprep.mubr.bf16.mxu0 0
    %541 = vmatmul.mubr.bf16.gmra.mrb[0].mxu0 %v503
    %v542 = vpop.f32.mrb[0].mxu0
    %v543 = vadd.f32 %v485, %v542
    %v544 = vpop.f32.mrb[0].mxu0
    %v545 = vpop.f32.mrb[0].mxu0
    %v546 = vpop.f32.mrb[0].mxu0
    %547 = vdwg.mxu0
    %v548 = vmax.f32 %v543, 0.0
    %v549 = vpack.c.bf16 %v548, %v548
    %v550 = vld [vmem:[%s127] sm:$0xf]
    %v551 = vld [vmem:[%s127 + $0x4] sm:$0xf]
    %v552 = vld [vmem:[%s127 + $0x8] sm:$0xf]
    %v553 = vld [vmem:[%s127 + $0xc] sm:$0xf]
    %v554 = vld [vmem:[%s127 + $0x10] sm:$0xf]
    %v555 = vld [vmem:[%s127 + $0x14] sm:$0xf]
    %v556 = vld [vmem:[%s127 + $0x18] sm:$0xf]
    %v557 = vld [vmem:[%s127 + $0x1c] sm:$0xf]
    %v558 = vld [vmem:[%s127 + $0x20] sm:$0xf]
    %v559 = vld [vmem:[%s127 + $0x24] sm:$0xf]
    %v560 = vld [vmem:[%s127 + $0x28] sm:$0xf]
    %v561 = vld [vmem:[%s127 + $0x2c] sm:$0xf]
    %v562 = vld [vmem:[%s127 + $0x30] sm:$0xf]
    %v563 = vld [vmem:[%s127 + $0x34] sm:$0xf]
    %v564 = vld [vmem:[%s127 + $0x38] sm:$0xf]
    %v565 = vld [vmem:[%s127 + $0x3c] sm:$0xf]
    %v566 = vld [vmem:[%s144] sm:$0x1]
    %v568 = vlaneseq
    %v569 = vshrl.u32 %v568, 7
    %v570 = vsub.s32 0, %v569
    %v571 = vrot.slane %v566, %v570
    %v589 = vunpack.c.l.b16 %v550
    %v590 = vunpack.c.l.b16 %v551
    %v591 = vunpack.c.l.b16 %v552
    %v592 = vunpack.c.l.b16 %v553
    %v593 = vunpack.c.l.b16 %v554
    %v594 = vunpack.c.l.b16 %v555
    %v595 = vunpack.c.l.b16 %v556
    %v596 = vunpack.c.l.b16 %v557
    %v597 = vunpack.c.l.b16 %v558
    %v598 = vunpack.c.l.b16 %v559
    %v599 = vunpack.c.l.b16 %v560
    %v600 = vunpack.c.l.b16 %v561
    %v601 = vunpack.c.l.b16 %v562
    %v602 = vunpack.c.l.b16 %v563
    %v603 = vunpack.c.l.b16 %v564
    %v604 = vunpack.c.l.b16 %v565
    %v605 = vpack.c.b16 %v590, %v589
    %v606 = vpack.c.b16 %v592, %v591
    %v607 = vpack.c.b16 %v594, %v593
    %v608 = vpack.c.b16 %v596, %v595
    %v609 = vpack.c.b16 %v598, %v597
    %v610 = vpack.c.b16 %v600, %v599
    %v611 = vpack.c.b16 %v602, %v601
    %v612 = vpack.c.b16 %v604, %v603
    %621 = vmatprep.subr.bf16.mxu0 0
    %622 = vmatpush1.bf16.msra.mxu0 %v605
    %623 = vmatprep.subr.bf16.mxu0 0
    %624 = vmatpush1.bf16.msra.mxu0 %v606
    %625 = vmatprep.subr.bf16.mxu0 0
    %626 = vmatpush1.bf16.msra.mxu0 %v607
    %627 = vmatprep.subr.bf16.mxu0 0
    %628 = vmatpush1.bf16.msra.mxu0 %v608
    %629 = vmatprep.subr.bf16.mxu0 0
    %630 = vmatpush1.bf16.msra.mxu0 %v609
    %631 = vmatprep.subr.bf16.mxu0 0
    %632 = vmatpush1.bf16.msra.mxu0 %v610
    %633 = vmatprep.subr.bf16.mxu0 0
    %634 = vmatpush1.bf16.msra.mxu0 %v611
    %635 = vmatprep.subr.bf16.mxu0 0
    %636 = vmatpush1.bf16.msra.mxu0 %v612
    %637 = vmatprep.subr.bf16.mxu0 0
    %638 = vmatpush1.bf16.msra.mxu0 0
    %639 = vmatprep.subr.bf16.mxu0 0
    %640 = vmatpush1.bf16.msra.mxu0 0
    %641 = vmatprep.subr.bf16.mxu0 0
    %642 = vmatpush1.bf16.msra.mxu0 0
    %643 = vmatprep.subr.bf16.mxu0 0
    %644 = vmatpush1.bf16.msra.mxu0 0
    %645 = vmatprep.subr.bf16.mxu0 0
    %646 = vmatpush1.bf16.msra.mxu0 0
    %647 = vmatprep.subr.bf16.mxu0 0
    %648 = vmatpush1.bf16.msra.mxu0 0
    %649 = vmatprep.subr.bf16.mxu0 0
    %650 = vmatpush1.bf16.msra.mxu0 0
    %651 = vmatprep.subr.bf16.mxu0 0
    %652 = vmatpush1.bf16.msra.mxu0 0
    %653 = vmatprep.mubr.bf16.mxu0 0
    %654 = vmatmul.mubr.bf16.gmra.mrb[0].mxu0 %v549
    %v655 = vpop.f32.mrb[0].mxu0
    %v656 = vadd.f32 %v571, %v655
    %v657 = vpop.f32.mrb[0].mxu0
    %v658 = vpop.f32.mrb[0].mxu0
    %v659 = vpop.f32.mrb[0].mxu0
    %660 = vdwg.mxu0
    %v661 = vmax.f32 %v656, 0.0
    %v662 = vpack.c.bf16 %v661, %v661
    %v663 = vld [vmem:[%s242] sm:$0xf]
    %v664 = vld [vmem:[%s242 + $0x4] sm:$0xf]
    %v665 = vld [vmem:[%s242 + $0x8] sm:$0xf]
    %v666 = vld [vmem:[%s242 + $0xc] sm:$0xf]
    %v667 = vld [vmem:[%s242 + $0x10] sm:$0xf]
    %v668 = vld [vmem:[%s242 + $0x14] sm:$0xf]
    %v669 = vld [vmem:[%s242 + $0x18] sm:$0xf]
    %v670 = vld [vmem:[%s242 + $0x1c] sm:$0xf]
    %v671 = vld [vmem:[%s242 + $0x20] sm:$0xf]
    %v672 = vld [vmem:[%s242 + $0x24] sm:$0xf]
    %v673 = vld [vmem:[%s242 + $0x28] sm:$0xf]
    %v674 = vld [vmem:[%s242 + $0x2c] sm:$0xf]
    %v675 = vld [vmem:[%s242 + $0x30] sm:$0xf]
    %v676 = vld [vmem:[%s242 + $0x34] sm:$0xf]
    %v677 = vld [vmem:[%s242 + $0x38] sm:$0xf]
    %v678 = vld [vmem:[%s242 + $0x3c] sm:$0xf]
    %v679 = vld [vmem:[%s259] sm:$0x1]
    %v681 = vlaneseq
    %v682 = vshrl.u32 %v681, 7
    %v683 = vsub.s32 0, %v682
    %v684 = vrot.slane %v679, %v683
    %v702 = vunpack.c.l.b16 %v663
    %v703 = vunpack.c.l.b16 %v664
    %v704 = vunpack.c.l.b16 %v665
    %v705 = vunpack.c.l.b16 %v666
    %v706 = vunpack.c.l.b16 %v667
    %v707 = vunpack.c.l.b16 %v668
    %v708 = vunpack.c.l.b16 %v669
    %v709 = vunpack.c.l.b16 %v670
    %v710 = vunpack.c.l.b16 %v671
    %v711 = vunpack.c.l.b16 %v672
    %v712 = vunpack.c.l.b16 %v673
    %v713 = vunpack.c.l.b16 %v674
    %v714 = vunpack.c.l.b16 %v675
    %v715 = vunpack.c.l.b16 %v676
    %v716 = vunpack.c.l.b16 %v677
    %v717 = vunpack.c.l.b16 %v678
    %v718 = vpack.c.b16 %v703, %v702
    %v719 = vpack.c.b16 %v705, %v704
    %v720 = vpack.c.b16 %v707, %v706
    %v721 = vpack.c.b16 %v709, %v708
    %v722 = vpack.c.b16 %v711, %v710
    %v723 = vpack.c.b16 %v713, %v712
    %v724 = vpack.c.b16 %v715, %v714
    %v725 = vpack.c.b16 %v717, %v716
    %734 = vmatprep.subr.bf16.mxu0 0
    %735 = vmatpush1.bf16.msra.mxu0 %v718
    %736 = vmatprep.subr.bf16.mxu0 0
    %737 = vmatpush1.bf16.msra.mxu0 %v719
    %738 = vmatprep.subr.bf16.mxu0 0
    %739 = vmatpush1.bf16.msra.mxu0 %v720
    %740 = vmatprep.subr.bf16.mxu0 0
    %741 = vmatpush1.bf16.msra.mxu0 %v721
    %742 = vmatprep.subr.bf16.mxu0 0
    %743 = vmatpush1.bf16.msra.mxu0 %v722
    %744 = vmatprep.subr.bf16.mxu0 0
    %745 = vmatpush1.bf16.msra.mxu0 %v723
    %746 = vmatprep.subr.bf16.mxu0 0
    %747 = vmatpush1.bf16.msra.mxu0 %v724
    %748 = vmatprep.subr.bf16.mxu0 0
    %749 = vmatpush1.bf16.msra.mxu0 %v725
    %750 = vmatprep.subr.bf16.mxu0 0
    %751 = vmatpush1.bf16.msra.mxu0 0
    %752 = vmatprep.subr.bf16.mxu0 0
    %753 = vmatpush1.bf16.msra.mxu0 0
    %754 = vmatprep.subr.bf16.mxu0 0
    %755 = vmatpush1.bf16.msra.mxu0 0
    %756 = vmatprep.subr.bf16.mxu0 0
    %757 = vmatpush1.bf16.msra.mxu0 0
    %758 = vmatprep.subr.bf16.mxu0 0
    %759 = vmatpush1.bf16.msra.mxu0 0
    %760 = vmatprep.subr.bf16.mxu0 0
    %761 = vmatpush1.bf16.msra.mxu0 0
    %762 = vmatprep.subr.bf16.mxu0 0
    %763 = vmatpush1.bf16.msra.mxu0 0
    %764 = vmatprep.subr.bf16.mxu0 0
    %765 = vmatpush1.bf16.msra.mxu0 0
    %766 = vmatprep.mubr.bf16.mxu0 0
    %767 = vmatmul.mubr.bf16.gmra.mrb[0].mxu0 %v662
    %v768 = vpop.f32.mrb[0].mxu0
    %v769 = vadd.f32 %v684, %v768
    %v770 = vpop.f32.mrb[0].mxu0
    %v771 = vpop.f32.mrb[0].mxu0
    %v772 = vpop.f32.mrb[0].mxu0
    %773 = vdwg.mxu0
    %v774 = vmax.f32 %v769, 0.0
    %v775 = vpack.c.bf16 %v774, %v774
    %v776 = vld [vmem:[%s357] sm:$0xf]
    %v777 = vld [vmem:[%s357 + $0x4] sm:$0xf]
    %v778 = vld [vmem:[%s357 + $0x8] sm:$0xf]
    %v779 = vld [vmem:[%s357 + $0xc] sm:$0xf]
    %v780 = vld [vmem:[%s357 + $0x10] sm:$0xf]
    %v781 = vld [vmem:[%s357 + $0x14] sm:$0xf]
    %v782 = vld [vmem:[%s357 + $0x18] sm:$0xf]
    %v783 = vld [vmem:[%s357 + $0x1c] sm:$0xf]
    %v784 = vld [vmem:[%s357 + $0x20] sm:$0xf]
    %v785 = vld [vmem:[%s357 + $0x24] sm:$0xf]
    %v786 = vld [vmem:[%s357 + $0x28] sm:$0xf]
    %v787 = vld [vmem:[%s357 + $0x2c] sm:$0xf]
    %v788 = vld [vmem:[%s357 + $0x30] sm:$0xf]
    %v789 = vld [vmem:[%s357 + $0x34] sm:$0xf]
    %v790 = vld [vmem:[%s357 + $0x38] sm:$0xf]
    %v791 = vld [vmem:[%s357 + $0x3c] sm:$0xf]
    %v792 = vld [vmem:[%s374] sm:$0x1]
    %v794 = vlaneseq
    %v795 = vshrl.u32 %v794, 7
    %v796 = vsub.s32 0, %v795
    %v797 = vrot.slane %v792, %v796
    %v815 = vunpack.c.l.b16 %v776
    %v816 = vunpack.c.l.b16 %v777
    %v817 = vunpack.c.l.b16 %v778
    %v818 = vunpack.c.l.b16 %v779
    %v819 = vunpack.c.l.b16 %v780
    %v820 = vunpack.c.l.b16 %v781
    %v821 = vunpack.c.l.b16 %v782
    %v822 = vunpack.c.l.b16 %v783
    %v823 = vunpack.c.l.b16 %v784
    %v824 = vunpack.c.l.b16 %v785
    %v825 = vunpack.c.l.b16 %v786
    %v826 = vunpack.c.l.b16 %v787
    %v827 = vunpack.c.l.b16 %v788
    %v828 = vunpack.c.l.b16 %v789
    %v829 = vunpack.c.l.b16 %v790
    %v830 = vunpack.c.l.b16 %v791
    %v831 = vpack.c.b16 %v816, %v815
    %v832 = vpack.c.b16 %v818, %v817
    %v833 = vpack.c.b16 %v820, %v819
    %v834 = vpack.c.b16 %v822, %v821
    %v835 = vpack.c.b16 %v824, %v823
    %v836 = vpack.c.b16 %v826, %v825
    %v837 = vpack.c.b16 %v828, %v827
    %v838 = vpack.c.b16 %v830, %v829
    %847 = vmatprep.subr.bf16.mxu0 0
    %848 = vmatpush1.bf16.msra.mxu0 %v831
    %849 = vmatprep.subr.bf16.mxu0 0
    %850 = vmatpush1.bf16.msra.mxu0 %v832
    %851 = vmatprep.subr.bf16.mxu0 0
    %852 = vmatpush1.bf16.msra.mxu0 %v833
    %853 = vmatprep.subr.bf16.mxu0 0
    %854 = vmatpush1.bf16.msra.mxu0 %v834
    %855 = vmatprep.subr.bf16.mxu0 0
    %856 = vmatpush1.bf16.msra.mxu0 %v835
    %857 = vmatprep.subr.bf16.mxu0 0
    %858 = vmatpush1.bf16.msra.mxu0 %v836
    %859 = vmatprep.subr.bf16.mxu0 0
    %860 = vmatpush1.bf16.msra.mxu0 %v837
    %861 = vmatprep.subr.bf16.mxu0 0
    %862 = vmatpush1.bf16.msra.mxu0 %v838
    %863 = vmatprep.subr.bf16.mxu0 0
    %864 = vmatpush1.bf16.msra.mxu0 0
    %865 = vmatprep.subr.bf16.mxu0 0
    %866 = vmatpush1.bf16.msra.mxu0 0
    %867 = vmatprep.subr.bf16.mxu0 0
    %868 = vmatpush1.bf16.msra.mxu0 0
    %869 = vmatprep.subr.bf16.mxu0 0
    %870 = vmatpush1.bf16.msra.mxu0 0
    %871 = vmatprep.subr.bf16.mxu0 0
    %872 = vmatpush1.bf16.msra.mxu0 0
    %873 = vmatprep.subr.bf16.mxu0 0
    %874 = vmatpush1.bf16.msra.mxu0 0
    %875 = vmatprep.subr.bf16.mxu0 0
    %876 = vmatpush1.bf16.msra.mxu0 0
    %877 = vmatprep.subr.bf16.mxu0 0
    %878 = vmatpush1.bf16.msra.mxu0 0
    %879 = vmatprep.mubr.bf16.mxu0 0
    %880 = vmatmul.mubr.bf16.gmra.mrb[0].mxu0 %v775
    %v881 = vpop.f32.mrb[0].mxu0
    %v882 = vadd.f32 %v797, %v881
    %v883 = vpop.f32.mrb[0].mxu0
    %v884 = vpop.f32.mrb[0].mxu0
    %v885 = vpop.f32.mrb[0].mxu0
    %886 = vdwg.mxu0
    %v887 = vmax.f32 %v882, 0.0
    %888 = vst.msk [vmem:[#allocation8] sm:$0x3] %vm471, %v887
    // Predicated region
    $region26: #{tpu_custom_call.1} parent=1 // pred_check
      _
    $region27: #{tpu_custom_call.1} parent=1 // pred_check_branch
      %890 = sbr.rel (0) target = $region29
    $region28: #{tpu_custom_call.1} parent=1 // pred_region
      %s892 = ssub.s32 32, 32
      %893 = vsyncadd [#allocation4], %s892
      %s895 = sshll.u32 [#allocation7], 4
      %s896 = int_to_ptr.vmem [resolvable:$true] %s895
      %898 = dma.vmem_to_hbm [thread:$0]  %s896, 32, %s4, [#allocation4]
    $region29: #{tpu_custom_call.1} parent=1 // pred_fallthru
      _
    // Predicated region
    $region30: #{tpu_custom_call.1} parent=1 // pred_check
      _
    $region31: #{tpu_custom_call.1} parent=1 // pred_check_branch
      %900 = sbr.rel (0) target = $region33
    $region32: #{tpu_custom_call.1} parent=1 // pred_region
      %s902 = ssub.s32 32, 32
      %903 = vsyncadd [#allocation9], %s902
      %s905 = sshll.u32 [#allocation8], 4
      %s906 = int_to_ptr.vmem [resolvable:$true] %s905
      %908 = dma.vmem_to_hbm [thread:$0]  %s906, 32, %s5, [#allocation9]
    $region33: #{tpu_custom_call.1} parent=1 // pred_fallthru
      _
    // Predicated region
    $region34: #{tpu_custom_call.1} parent=1 // pred_check
      _
    $region35: #{tpu_custom_call.1} parent=1 // pred_check_branch
      %910 = sbr.rel (0) target = $region37
    $region36: #{tpu_custom_call.1} parent=1 // pred_region
      %911 = dma.done [#allocation4], 32
    $region37: #{tpu_custom_call.1} parent=1 // pred_fallthru
      _
    // Predicated region
    $region38: #{tpu_custom_call.1} parent=1 // pred_check
      _
    $region39: #{tpu_custom_call.1} parent=1 // pred_check_branch
      %913 = sbr.rel (0) target = $region41
    $region40: #{tpu_custom_call.1} parent=1 // pred_region
      %914 = dma.done [#allocation9], 32
    $region41: #{tpu_custom_call.1} parent=1 // pred_fallthru
      _
    %915 = vsyncpa [#allocation3], 1
    %916 = vsyncpa [#allocation6], 1
    %917 = vsyncpa [#allocation4], 1
    %918 = vsyncpa [#allocation9], 1

</llo_original>
